<compile_context>
chip_gen: v7x
topology: tpu7x:2x2x1
jax: 0.10.0
libtpu: 0.0.40
codegen_flags: <defaults>
</compile_context>

<pallas_src>
import jax
import jax.numpy as jnp
from jax.experimental import pallas as pl
from jax.experimental.pallas import tpu as pltpu


# ----------------------------- kernel body ---------------------------------

def _biasfree_ln_kernel(x_ref, w_ref, o_ref):
    # x_ref: (tm, C) row tile; w_ref: (1, C) resident weight; o_ref: (tm, C)
    x = x_ref[...].astype(jnp.float32)
    w = w_ref[...].astype(jnp.float32)                     # (1, C)

    mu = jnp.mean(x, axis=-1, keepdims=True)               # (tm, 1)
    d = x - mu
    var = jnp.mean(d * d, axis=-1, keepdims=True)          # unbiased=False (ddof=0)
    inv = jax.lax.rsqrt(var + 1e-5)                        # (tm, 1)

    # BiasFree semantics: scale the RAW x (not x - mu).
    o_ref[...] = (x * (inv * w)).astype(o_ref.dtype)


# ----------------------------- tile sizing ----------------------------------

def _block_targets():
    """(target_block_bytes, row_cap) tuned per TPU generation."""
    kind = ""
    try:
        kind = jax.devices()[0].device_kind.lower()
    except Exception:
        pass
    if "v7" in kind:
        return 4 << 20, 16384          # v7x: 3.2 TB/s HBM, hide 0.35 us/step overhead
    if "v5" in kind:
        return 2 << 20, 4096           # v5e: lowest BW, keep VMEM modest
    return 2 << 20, 8192               # v6e and default


def _choose_tm(m_rows: int, c: int, itemsize: int) -> int:
    if m_rows <= 8:
        return max(1, m_rows)          # block == full dim (allowed by (8,128) rule)
    target_bytes, row_cap = _block_targets()
    tm = max(8, (target_bytes // max(1, c * itemsize)) // 8 * 8)
    tm = min(tm, row_cap)
    # >= 4 grid steps so each TensorCore (v7x megacore) gets >= 2 pipelined iters.
    quarter = max(8, (((m_rows + 3) // 4) + 7) // 8 * 8)
    tm = min(tm, quarter)
    return max(8, (tm // 8) * 8)


def _normalize_tm(tm: int, m_rows: int) -> int:
    tm = int(tm)
    if m_rows <= 8 or tm >= m_rows:
        return m_rows
    return max(8, (tm // 8) * 8)


# ------------------------------- wrapper ------------------------------------

def biasfree_layernorm(x, weight, *, tm=None, donate_x=False):
    """x: (..., C) array, weight: (C,). Returns same shape/dtype as x."""
    orig_shape = x.shape
    C = orig_shape[-1]
    x2d = x.reshape(-1, C)
    M = x2d.shape[0]

    itemsize = jnp.dtype(x.dtype).itemsize
    if tm is None:
        tm = _choose_tm(M, C, itemsize)
    else:
        tm = _normalize_tm(tm, M)

    grid = pl.cdiv(M, tm)   # ragged last block: OOB reads feed only masked-out rows
    w2d = weight.reshape(1, C)

    call_kwargs = {}
    if donate_x:
        # Only safe if the caller does not reuse x afterwards.
        call_kwargs["input_output_aliases"] = {0: 0}

    out = pl.pallas_call(
        _biasfree_ln_kernel,
        out_shape=jax.ShapeDtypeStruct((M, C), x.dtype),
        grid_spec=pltpu.PrefetchScalarGridSpec(
            num_scalar_prefetch=0,
            grid=(grid,),
            in_specs=[
                pl.BlockSpec((tm, C), lambda i: (i, 0)),   # x row tile (full C width)
                pl.BlockSpec((1, C), lambda i: (0, 0)),    # weight (resident)
            ],
            out_specs=pl.BlockSpec((tm, C), lambda i: (i, 0)),
        ),
        compiler_params=pltpu.CompilerParams(
            dimension_semantics=("parallel",),
            vmem_limit_bytes=32 * 1024 * 1024,
        ),
        **call_kwargs,
    )(x2d, w2d)

    return out.reshape(orig_shape)


# ------------------------------ reference -----------------------------------

def _reference(x, weight):
    x32 = x.astype(jnp.float32)
    var = jnp.var(x32, axis=-1, keepdims=True)             # ddof=0 == unbiased=False
    return (x32 / jnp.sqrt(var + 1e-5) * weight.astype(jnp.float32)).astype(x.dtype)


if __name__ == "__main__":
    key = jax.random.PRNGKey(0)

    # Diff-Mamba usage: (B, C, H, W) feature map rearranged 'b c h w -> b (h w) c'
    # before the LayerNorm over the channel dim.
    B, C, H, W = 2, 48, 16, 16
    x4d = jax.random.normal(key, (B, C, H, W), dtype=jnp.float32)
    x = jnp.transpose(x4d, (0, 2, 3, 1)).reshape(B, H * W, C)   # (B, HW, C)

    # Parameter init as in the module's __init__: weight = ones(C).
    weight = jnp.ones((C,), dtype=jnp.float32)

    out = jax.block_until_ready(biasfree_layernorm(x, weight))
    ref = _reference(x, weight)
    assert out.shape == x.shape and out.dtype == x.dtype
    assert jnp.allclose(out, ref, atol=1e-5, rtol=1e-5), "mismatch vs reference"

    # Ragged row count (M % tm != 0), lane-multiple C, and non-trivial weight.
    x_odd = jax.random.normal(jax.random.PRNGKey(1), (3, 37, 256), dtype=jnp.float32)
    w_odd = 1.0 + 0.1 * jax.random.normal(jax.random.PRNGKey(2), (256,), dtype=jnp.float32)
    out_odd = jax.block_until_ready(biasfree_layernorm(x_odd, w_odd))
    assert jnp.allclose(out_odd, _reference(x_odd, w_odd), atol=1e-5, rtol=1e-5)

    # Tiny-M edge case (block == full row dim).
    x_tiny = jax.random.normal(jax.random.PRNGKey(3), (1, 5, 48), dtype=jnp.float32)
    out_tiny = jax.block_until_ready(biasfree_layernorm(x_tiny, weight))
    assert jnp.allclose(out_tiny, _reference(x_tiny, weight), atol=1e-5, rtol=1e-5)

    print("KERNEL_OK")
</pallas_src>

<mosaic_0001>
module attributes {stable_mosaic.version = 11 : i64} {
  func.func @_biasfree_ln_kernel(%arg0: i32, %arg1: memref<128x48xf32, #tpu.memory_space<vmem>>, %arg2: memref<1x48xf32, #tpu.memory_space<vmem>>, %arg3: memref<128x48xf32, #tpu.memory_space<vmem>>) attributes {dimension_semantics = [#tpu.dimension_semantics<parallel>], iteration_bounds = array<i64: 4>, scalar_prefetch = 0 : i64, scratch_operands = 0 : i64, tpu.core_type = #tpu.core_type<tc>, window_params = [{transform_indices = @transform_0, window_bounds = array<i64: 128, 48>}, {pipeline_mode = #tpu.pipeline_mode<synchronous>, transform_indices = @transform_1, window_bounds = array<i64: 1, 48>}, {transform_indices = @transform_2, window_bounds = array<i64: 128, 48>}]} {
    %c0 = arith.constant 0 : index
    %c0_0 = arith.constant 0 : index
    %0 = vector.load %arg1[%c0, %c0_0] : memref<128x48xf32, #tpu.memory_space<vmem>>, vector<128x48xf32>
    %c0_1 = arith.constant 0 : index
    %c0_2 = arith.constant 0 : index
    %1 = vector.load %arg2[%c0_1, %c0_2] : memref<1x48xf32, #tpu.memory_space<vmem>>, vector<1x48xf32>
    %cst = arith.constant dense<0.000000e+00> : vector<128xf32>
    %2 = vector.multi_reduction <add>, %0, %cst [1] : vector<128x48xf32> to vector<128xf32>
    %3 = vector.shape_cast %2 : vector<128xf32> to vector<128x1xf32>
    %cst_3 = arith.constant 4.800000e+01 : f32
    %4 = vector.broadcast %cst_3 : f32 to vector<128x1xf32>
    %5 = arith.divf %3, %4 : vector<128x1xf32>
    %6 = vector.broadcast %5 : vector<128x1xf32> to vector<128x48xf32>
    %7 = arith.subf %0, %6 : vector<128x48xf32>
    %8 = arith.mulf %7, %7 : vector<128x48xf32>
    %cst_4 = arith.constant dense<0.000000e+00> : vector<128xf32>
    %9 = vector.multi_reduction <add>, %8, %cst_4 [1] : vector<128x48xf32> to vector<128xf32>
    %10 = vector.shape_cast %9 : vector<128xf32> to vector<128x1xf32>
    %cst_5 = arith.constant 4.800000e+01 : f32
    %11 = vector.broadcast %cst_5 : f32 to vector<128x1xf32>
    %12 = arith.divf %10, %11 : vector<128x1xf32>
    %cst_6 = arith.constant 9.99999974E-6 : f32
    %13 = vector.broadcast %cst_6 : f32 to vector<128x1xf32>
    %14 = arith.addf %12, %13 : vector<128x1xf32>
    %15 = math.rsqrt %14 : vector<128x1xf32>
    %16 = vector.broadcast %15 : vector<128x1xf32> to vector<128x48xf32>
    %17 = vector.broadcast %1 : vector<1x48xf32> to vector<128x48xf32>
    %18 = arith.mulf %16, %17 : vector<128x48xf32>
    %19 = arith.mulf %0, %18 : vector<128x48xf32>
    %c0_7 = arith.constant 0 : index
    %c0_8 = arith.constant 0 : index
    %20 = vector.load %arg3[%c0_7, %c0_8] : memref<128x48xf32, #tpu.memory_space<vmem>>, vector<128x48xf32>
    tpu.vector_store %arg3[%c0_7, %c0_8], %19 {strides = array<i32>} : memref<128x48xf32, #tpu.memory_space<vmem>>, vector<128x48xf32>,
    return
  }
  func.func @transform_0(%arg0: i32) -> (i32, i32) {
    %c0_i32 = arith.constant 0 : i32
    %c0_i32_0 = arith.constant 0 : i32
    return %arg0, %c0_i32 : i32, i32
  }
  func.func @transform_1(%arg0: i32) -> (i32, i32) {
    %c0_i32 = arith.constant 0 : i32
    %c0_i32_0 = arith.constant 0 : i32
    %c0_i32_1 = arith.constant 0 : i32
    return %c0_i32, %c0_i32_0 : i32, i32
  }
  func.func @transform_2(%arg0: i32) -> (i32, i32) {
    %c0_i32 = arith.constant 0 : i32
    %c0_i32_0 = arith.constant 0 : i32
    return %arg0, %c0_i32 : i32, i32
  }
}

</mosaic_0001>

<llo_original>
// kernel: tpu_custom_call.1
$region0: #{tpu_custom_call.1}
  #allocation0 [shape = 'u32[]', space=smem, size = 0x4, offset = 0x4, fixed_abs, tag = 'smem constant byte address 0x4 - core index']
  #allocation1 [shape = 'u32[144,128]{1,0:T(1,128)}', space=vmem, size = 0x12000, scoped, tag = 'internal scratch']
  %s0 = inlined_call_operand.vmem [shape: f32[512,48], index: 0, kind: input, shape index: {}]
  %s1 = inlined_call_operand.vmem [shape: f32[1,48], index: 1, kind: input, shape index: {}]
  %s2 = inlined_call_operand.vmem [shape: f32[512,48], index: 2, kind: output, shape index: {}]
  %s3 = sld [smem:[#allocation0]]
  $region41: #{tpu_custom_call.1} parent=0
    _
  %s5 = ssub.s32 1, %s3
  %s6 = scalar_select 0, %s5, %s3
  loop: start=0, step=1, limit=6
  $region2: #{tpu_custom_call.1} parent=0 // loop_pre_header
    _
  $region3: #{tpu_custom_call.1} parent=0 // loop_header
    %s8 = sphi 0, %s12
    %p9 = scmp.ge.s32.totalorder %s8, 6
    %s18 = sphi 0, %s20
    %s21 = sphi 0, %s18
    %s22 = sphi 0, %s21
    %s38 = sphi 0, %s22
    %s42 = sphi 0, %s42
    %s44 = sphi 0, %s42
    %s45 = sphi 0, %s44
    %s59 = sphi 0, %s45
    %s65 = sphi 0, %s67
    %s68 = sphi 0, %s65
    %s69 = sphi 0, %s68
    %s85 = sphi 0, %s69
  $region4: #{tpu_custom_call.1} parent=0 // loop_header_branch
    %11 = sbr.rel (%p9) target = $region8
  $region5: #{tpu_custom_call.1} parent=0 // loop_body
    %s13 = ssub.s32 %s8, 1
    %s14 = ssub.s32 %s8, 2
    %s15 = sadd.s32 %s8, 1
    %s16 = ssub.s32 %s8, %s15
    %p17 = scmp.eq.s32.totalorder %s16, 0
    %s19 = sadd.s32 %s18, 1
    %s20 = scalar_select %p17, %s18, %s19
    %p23 = pneg %p17
    %p24 = scmp.eq.s32.totalorder %s8, 3
    %p25 = por %p23, %p24
    %p26 = scmp.ne.s32.totalorder %s18, %s21
    %p27 = scmp.eq.s32.totalorder %s8, 0
    %p28 = por %p26, %p27
    %p29 = scmp.ne.s32.totalorder %s18, %s21
    %p30 = scmp.eq.s32.totalorder %s13, 3
    %p31 = por %p29, %p30
    %p32 = scmp.ne.s32.totalorder %s21, %s22
    %p33 = scmp.eq.s32.totalorder %s13, 0
    %p34 = por %p32, %p33
    %p35 = scmp.ne.s32.totalorder %s21, %s22
    %p36 = scmp.eq.s32.totalorder %s14, 3
    %p37 = por %p35, %p36
    %p39 = scmp.ne.s32.totalorder %s22, %s38
    %p40 = scmp.eq.s32.totalorder %s14, 0
    %p41 = por %p39, %p40
    %s43 = sadd.s32 %s42, 1
    %p46 = scmp.eq.s32.totalorder %s8, 3
    %p47 = scmp.ne.s32.totalorder %s42, %s44
    %p48 = scmp.eq.s32.totalorder %s8, 0
    %p49 = por %p47, %p48
    %p50 = scmp.ne.s32.totalorder %s42, %s44
    %p51 = scmp.eq.s32.totalorder %s13, 3
    %p52 = por %p50, %p51
    %p53 = scmp.ne.s32.totalorder %s44, %s45
    %p54 = scmp.eq.s32.totalorder %s13, 0
    %p55 = por %p53, %p54
    %p56 = scmp.ne.s32.totalorder %s44, %s45
    %p57 = scmp.eq.s32.totalorder %s14, 3
    %p58 = por %p56, %p57
    %p60 = scmp.ne.s32.totalorder %s45, %s59
    %p61 = scmp.eq.s32.totalorder %s14, 0
    %p62 = por %p60, %p61
    %s63 = ssub.s32 %s8, %s15
    %p64 = scmp.eq.s32.totalorder %s63, 0
    %s66 = sadd.s32 %s65, 1
    %s67 = scalar_select %p64, %s65, %s66
    %p70 = pneg %p64
    %p71 = scmp.eq.s32.totalorder %s8, 3
    %p72 = por %p70, %p71
    %p73 = scmp.ne.s32.totalorder %s65, %s68
    %p74 = scmp.eq.s32.totalorder %s8, 0
    %p75 = por %p73, %p74
    %p76 = scmp.ne.s32.totalorder %s65, %s68
    %p77 = scmp.eq.s32.totalorder %s13, 3
    %p78 = por %p76, %p77
    %p79 = scmp.ne.s32.totalorder %s68, %s69
    %p80 = scmp.eq.s32.totalorder %s13, 0
    %p81 = por %p79, %p80
    %p82 = scmp.ne.s32.totalorder %s68, %s69
    %p83 = scmp.eq.s32.totalorder %s14, 3
    %p84 = por %p82, %p83
    %p86 = scmp.ne.s32.totalorder %s69, %s85
    %p87 = scmp.eq.s32.totalorder %s14, 0
    %p88 = por %p86, %p87
    %p89 = scmp.le.s32.totalorder 1, %s8
    %p90 = scmp.lt.s32.totalorder %s8, 5
    %p91 = pnand %p89, %p90
    %p92 = pneg %p91
    // Predicated region
    $region9: #{tpu_custom_call.1} parent=5 // pred_check
      _
    $region10: #{tpu_custom_call.1} parent=5 // pred_check_branch
      %94 = sbr.rel (%p91) target = $region12
    $region11: #{tpu_custom_call.1} parent=5 // pred_region
      %s95 = ssub.s32 %s8, 1
      // Predicated region
      $region13: #{tpu_custom_call.1} parent=11 // pred_check
        %p96 = pneg %p55
      $region14: #{tpu_custom_call.1} parent=11 // pred_check_branch
        %98 = sbr.rel (%p96) target = $region16
      $region15: #{tpu_custom_call.1} parent=11 // pred_region
        _
      $region16: #{tpu_custom_call.1} parent=11 // pred_fallthru
        _
    $region12: #{tpu_custom_call.1} parent=5 // pred_fallthru
      _
    %p99 = scmp.lt.s32.totalorder %s8, 4
    // Predicated region
    $region17: #{tpu_custom_call.1} parent=5 // pred_check
      %p100 = pneg %p99
    $region18: #{tpu_custom_call.1} parent=5 // pred_check_branch
      %102 = sbr.rel (%p100) target = $region20
    $region19: #{tpu_custom_call.1} parent=5 // pred_region
      // Predicated region
      $region21: #{tpu_custom_call.1} parent=19 // pred_check
        %p103 = pneg %p28
      $region22: #{tpu_custom_call.1} parent=19 // pred_check_branch
        %105 = sbr.rel (%p103) target = $region24
      $region23: #{tpu_custom_call.1} parent=19 // pred_region
        %s106 = smul.u32 16, %s8
        %p107 = scmp.lt.s32.totalorder %s106, 63
        %s108 = scalar_select %p107, %s106, 63
        %s109 = smul.addr %s108, 8
        %s110 = scalar_lea.vmem %s0, %s109
        %s111 = smul.u32 16, %s8
      $region24: #{tpu_custom_call.1} parent=19 // pred_fallthru
        _
    $region20: #{tpu_custom_call.1} parent=5 // pred_fallthru
      _
    %p112 = scmp.le.s32.totalorder 1, %s8
    %p113 = scmp.lt.s32.totalorder %s8, 5
    %p114 = pnand %p112, %p113
    %p115 = pneg %p114
    // Predicated region
    $region25: #{tpu_custom_call.1} parent=5 // pred_check
      _
    $region26: #{tpu_custom_call.1} parent=5 // pred_check_branch
      %117 = sbr.rel (%p114) target = $region28
    $region27: #{tpu_custom_call.1} parent=5 // pred_region
      %s118 = ssub.s32 %s8, 1
      %s119 = smul.u32 16, %s13
      %p120 = scmp.lt.s32.totalorder %s119, 63
      %s121 = scalar_select %p120, %s119, 63
      %s122 = smul.addr %s121, 8
      %s123 = scalar_lea.vmem %s0, %s122
      %p124 = pneg %p34
      %p125 = pneg %p31
      %p126 = pneg %p55
      %p127 = pneg %p52
      %p128 = pneg %p81
      %p129 = pneg %p78
      %s130 = smul.u32 16, %s13
      %p131 = scmp.lt.s32.totalorder %s130, 63
      %s132 = scalar_select %p131, %s130, 63
      %s133 = smul.addr %s132, 8
      %s134 = scalar_lea.vmem %s2, %s133
      %s135 = smul.u32 16, %s13
      %p136 = scmp.lt.s32.totalorder %s135, 63
      %s137 = scalar_select %p136, %s135, 63
      %s138 = smul.addr %s137, 8
      %s139 = scalar_lea.vmem %s0, %s138
      %s140 = smul.u32 16, %s13
      %s141 = smul.u32 16, %s13
      %p142 = scmp.lt.s32.totalorder %s141, 63
      %s143 = scalar_select %p142, %s141, 63
      %s144 = smul.addr %s143, 8
      %s145 = scalar_lea.vmem %s2, %s144
      %s146 = smul.u32 16, %s13
      %v147 = vld [vmem:[%s139] sm:$0xff]
      %v148 = vld [vmem:[%s139 + $0x8] sm:$0xff]
      %v149 = vld [vmem:[%s139 + $0x10] sm:$0xff]
      %v150 = vld [vmem:[%s139 + $0x18] sm:$0xff]
      %v151 = vld [vmem:[%s139 + $0x20] sm:$0xff]
      %v152 = vld [vmem:[%s139 + $0x28] sm:$0xff]
      %v153 = vld [vmem:[%s139 + $0x30] sm:$0xff]
      %v154 = vld [vmem:[%s139 + $0x38] sm:$0xff]
      %v155 = vld [vmem:[%s139 + $0x40] sm:$0xff]
      %v156 = vld [vmem:[%s139 + $0x48] sm:$0xff]
      %v157 = vld [vmem:[%s139 + $0x50] sm:$0xff]
      %v158 = vld [vmem:[%s139 + $0x58] sm:$0xff]
      %v159 = vld [vmem:[%s139 + $0x60] sm:$0xff]
      %v160 = vld [vmem:[%s139 + $0x68] sm:$0xff]
      %v161 = vld [vmem:[%s139 + $0x70] sm:$0xff]
      %v162 = vld [vmem:[%s139 + $0x78] sm:$0xff]
      %v163 = vld [vmem:[%s1] sm:$0x1]
      %vm164 = vcmask 392192
      %v165 = vsel %vm164, %v147, 0.0
      %166 = vadd.xlane.f32.xlu0 %v165
      %v167 = vpop.xlane.xlu0 %166
      %v168 = vsel %vm164, %v148, 0.0
      %169 = vadd.xlane.f32.xlu0 %v168
      %v170 = vpop.xlane.xlu0 %169
      %v171 = vsel %vm164, %v149, 0.0
      %172 = vadd.xlane.f32.xlu0 %v171
      %v173 = vpop.xlane.xlu0 %172
      %v174 = vsel %vm164, %v150, 0.0
      %175 = vadd.xlane.f32.xlu0 %v174
      %v176 = vpop.xlane.xlu0 %175
      %v177 = vsel %vm164, %v151, 0.0
      %178 = vadd.xlane.f32.xlu0 %v177
      %v179 = vpop.xlane.xlu0 %178
      %v180 = vsel %vm164, %v152, 0.0
      %181 = vadd.xlane.f32.xlu0 %v180
      %v182 = vpop.xlane.xlu0 %181
      %v183 = vsel %vm164, %v153, 0.0
      %184 = vadd.xlane.f32.xlu0 %v183
      %v185 = vpop.xlane.xlu0 %184
      %v186 = vsel %vm164, %v154, 0.0
      %187 = vadd.xlane.f32.xlu0 %v186
      %v188 = vpop.xlane.xlu0 %187
      %v189 = vsel %vm164, %v155, 0.0
      %190 = vadd.xlane.f32.xlu0 %v189
      %v191 = vpop.xlane.xlu0 %190
      %v192 = vsel %vm164, %v156, 0.0
      %193 = vadd.xlane.f32.xlu0 %v192
      %v194 = vpop.xlane.xlu0 %193
      %v195 = vsel %vm164, %v157, 0.0
      %196 = vadd.xlane.f32.xlu0 %v195
      %v197 = vpop.xlane.xlu0 %196
      %v198 = vsel %vm164, %v158, 0.0
      %199 = vadd.xlane.f32.xlu0 %v198
      %v200 = vpop.xlane.xlu0 %199
      %v201 = vsel %vm164, %v159, 0.0
      %202 = vadd.xlane.f32.xlu0 %v201
      %v203 = vpop.xlane.xlu0 %202
      %v204 = vsel %vm164, %v160, 0.0
      %205 = vadd.xlane.f32.xlu0 %v204
      %v206 = vpop.xlane.xlu0 %205
      %v207 = vsel %vm164, %v161, 0.0
      %208 = vadd.xlane.f32.xlu0 %v207
      %v209 = vpop.xlane.xlu0 %208
      %v210 = vsel %vm164, %v162, 0.0
      %211 = vadd.xlane.f32.xlu0 %v210
      %v212 = vpop.xlane.xlu0 %211
      %v213 = vrcp.pop 48.0
      %v214 = vmul.f32 %v167, %v213
      %v215 = vmul.f32 %v170, %v213
      %v216 = vmul.f32 %v173, %v213
      %v217 = vmul.f32 %v176, %v213
      %v218 = vmul.f32 %v179, %v213
      %v219 = vmul.f32 %v182, %v213
      %v220 = vmul.f32 %v185, %v213
      %v221 = vmul.f32 %v188, %v213
      %v222 = vmul.f32 %v191, %v213
      %v223 = vmul.f32 %v194, %v213
      %v224 = vmul.f32 %v197, %v213
      %v225 = vmul.f32 %v200, %v213
      %v226 = vmul.f32 %v203, %v213
      %v227 = vmul.f32 %v206, %v213
      %v228 = vmul.f32 %v209, %v213
      %v229 = vmul.f32 %v212, %v213
      %v230 = vsub.f32 %v147, %v214
      %v231 = vsub.f32 %v148, %v215
      %v232 = vsub.f32 %v149, %v216
      %v233 = vsub.f32 %v150, %v217
      %v234 = vsub.f32 %v151, %v218
      %v235 = vsub.f32 %v152, %v219
      %v236 = vsub.f32 %v153, %v220
      %v237 = vsub.f32 %v154, %v221
      %v238 = vsub.f32 %v155, %v222
      %v239 = vsub.f32 %v156, %v223
      %v240 = vsub.f32 %v157, %v224
      %v241 = vsub.f32 %v158, %v225
      %v242 = vsub.f32 %v159, %v226
      %v243 = vsub.f32 %v160, %v227
      %v244 = vsub.f32 %v161, %v228
      %v245 = vsub.f32 %v162, %v229
      %v246 = vmul.f32 %v230, %v230
      %v247 = vmul.f32 %v231, %v231
      %v248 = vmul.f32 %v232, %v232
      %v249 = vmul.f32 %v233, %v233
      %v250 = vmul.f32 %v234, %v234
      %v251 = vmul.f32 %v235, %v235
      %v252 = vmul.f32 %v236, %v236
      %v253 = vmul.f32 %v237, %v237
      %v254 = vmul.f32 %v238, %v238
      %v255 = vmul.f32 %v239, %v239
      %v256 = vmul.f32 %v240, %v240
      %v257 = vmul.f32 %v241, %v241
      %v258 = vmul.f32 %v242, %v242
      %v259 = vmul.f32 %v243, %v243
      %v260 = vmul.f32 %v244, %v244
      %v261 = vmul.f32 %v245, %v245
      %v262 = vsel %vm164, %v246, 0.0
      %263 = vadd.xlane.f32.xlu0 %v262
      %v264 = vpop.xlane.xlu0 %263
      %v265 = vsel %vm164, %v247, 0.0
      %266 = vadd.xlane.f32.xlu0 %v265
      %v267 = vpop.xlane.xlu0 %266
      %v268 = vsel %vm164, %v248, 0.0
      %269 = vadd.xlane.f32.xlu0 %v268
      %v270 = vpop.xlane.xlu0 %269
      %v271 = vsel %vm164, %v249, 0.0
      %272 = vadd.xlane.f32.xlu0 %v271
      %v273 = vpop.xlane.xlu0 %272
      %v274 = vsel %vm164, %v250, 0.0
      %275 = vadd.xlane.f32.xlu0 %v274
      %v276 = vpop.xlane.xlu0 %275
      %v277 = vsel %vm164, %v251, 0.0
      %278 = vadd.xlane.f32.xlu0 %v277
      %v279 = vpop.xlane.xlu0 %278
      %v280 = vsel %vm164, %v252, 0.0
      %281 = vadd.xlane.f32.xlu0 %v280
      %v282 = vpop.xlane.xlu0 %281
      %v283 = vsel %vm164, %v253, 0.0
      %284 = vadd.xlane.f32.xlu0 %v283
      %v285 = vpop.xlane.xlu0 %284
      %v286 = vsel %vm164, %v254, 0.0
      %287 = vadd.xlane.f32.xlu0 %v286
      %v288 = vpop.xlane.xlu0 %287
      %v289 = vsel %vm164, %v255, 0.0
      %290 = vadd.xlane.f32.xlu0 %v289
      %v291 = vpop.xlane.xlu0 %290
      %v292 = vsel %vm164, %v256, 0.0
      %293 = vadd.xlane.f32.xlu0 %v292
      %v294 = vpop.xlane.xlu0 %293
      %v295 = vsel %vm164, %v257, 0.0
      %296 = vadd.xlane.f32.xlu0 %v295
      %v297 = vpop.xlane.xlu0 %296
      %v298 = vsel %vm164, %v258, 0.0
      %299 = vadd.xlane.f32.xlu0 %v298
      %v300 = vpop.xlane.xlu0 %299
      %v301 = vsel %vm164, %v259, 0.0
      %302 = vadd.xlane.f32.xlu0 %v301
      %v303 = vpop.xlane.xlu0 %302
      %v304 = vsel %vm164, %v260, 0.0
      %305 = vadd.xlane.f32.xlu0 %v304
      %v306 = vpop.xlane.xlu0 %305
      %v307 = vsel %vm164, %v261, 0.0
      %308 = vadd.xlane.f32.xlu0 %v307
      %v309 = vpop.xlane.xlu0 %308
      %v310 = vmul.f32 %v264, %v213
      %v311 = vmul.f32 %v267, %v213
      %v312 = vmul.f32 %v270, %v213
      %v313 = vmul.f32 %v273, %v213
      %v314 = vmul.f32 %v276, %v213
      %v315 = vmul.f32 %v279, %v213
      %v316 = vmul.f32 %v282, %v213
      %v317 = vmul.f32 %v285, %v213
      %v318 = vmul.f32 %v288, %v213
      %v319 = vmul.f32 %v291, %v213
      %v320 = vmul.f32 %v294, %v213
      %v321 = vmul.f32 %v297, %v213
      %v322 = vmul.f32 %v300, %v213
      %v323 = vmul.f32 %v303, %v213
      %v324 = vmul.f32 %v306, %v213
      %v325 = vmul.f32 %v309, %v213
      %v326 = vadd.f32 %v310, 1e-05
      %v327 = vadd.f32 %v311, 1e-05
      %v328 = vadd.f32 %v312, 1e-05
      %v329 = vadd.f32 %v313, 1e-05
      %v330 = vadd.f32 %v314, 1e-05
      %v331 = vadd.f32 %v315, 1e-05
      %v332 = vadd.f32 %v316, 1e-05
      %v333 = vadd.f32 %v317, 1e-05
      %v334 = vadd.f32 %v318, 1e-05
      %v335 = vadd.f32 %v319, 1e-05
      %v336 = vadd.f32 %v320, 1e-05
      %v337 = vadd.f32 %v321, 1e-05
      %v338 = vadd.f32 %v322, 1e-05
      %v339 = vadd.f32 %v323, 1e-05
      %v340 = vadd.f32 %v324, 1e-05
      %v341 = vadd.f32 %v325, 1e-05
      %v342 = vrsqrt.pop %v326
      %v343 = vrsqrt.pop %v327
      %v344 = vrsqrt.pop %v328
      %v345 = vrsqrt.pop %v329
      %v346 = vrsqrt.pop %v330
      %v347 = vrsqrt.pop %v331
      %v348 = vrsqrt.pop %v332
      %v349 = vrsqrt.pop %v333
      %v350 = vrsqrt.pop %v334
      %v351 = vrsqrt.pop %v335
      %v352 = vrsqrt.pop %v336
      %v353 = vrsqrt.pop %v337
      %v354 = vrsqrt.pop %v338
      %v355 = vrsqrt.pop %v339
      %v356 = vrsqrt.pop %v340
      %v357 = vrsqrt.pop %v341
      %v359 = vlaneseq
      %v360 = vshrl.u32 %v359, 7
      %v361 = vsub.s32 0, %v360
      %v362 = vrot.slane %v163, %v361
      %v364 = vmul.f32 %v342, %v362
      %v365 = vmul.f32 %v343, %v362
      %v366 = vmul.f32 %v344, %v362
      %v367 = vmul.f32 %v345, %v362
      %v368 = vmul.f32 %v346, %v362
      %v369 = vmul.f32 %v347, %v362
      %v370 = vmul.f32 %v348, %v362
      %v371 = vmul.f32 %v349, %v362
      %v372 = vmul.f32 %v350, %v362
      %v373 = vmul.f32 %v351, %v362
      %v374 = vmul.f32 %v352, %v362
      %v375 = vmul.f32 %v353, %v362
      %v376 = vmul.f32 %v354, %v362
      %v377 = vmul.f32 %v355, %v362
      %v378 = vmul.f32 %v356, %v362
      %v379 = vmul.f32 %v357, %v362
      %v380 = vmul.f32 %v147, %v364
      %v381 = vmul.f32 %v148, %v365
      %v382 = vmul.f32 %v149, %v366
      %v383 = vmul.f32 %v150, %v367
      %v384 = vmul.f32 %v151, %v368
      %v385 = vmul.f32 %v152, %v369
      %v386 = vmul.f32 %v153, %v370
      %v387 = vmul.f32 %v154, %v371
      %v388 = vmul.f32 %v155, %v372
      %v389 = vmul.f32 %v156, %v373
      %v390 = vmul.f32 %v157, %v374
      %v391 = vmul.f32 %v158, %v375
      %v392 = vmul.f32 %v159, %v376
      %v393 = vmul.f32 %v160, %v377
      %v394 = vmul.f32 %v161, %v378
      %v395 = vmul.f32 %v162, %v379
      %396 = vst.msk [vmem:[%s145] sm:$0xff] %vm164, %v380
      %397 = vst.msk [vmem:[%s145 + $0x8] sm:$0xff] %vm164, %v381
      %398 = vst.msk [vmem:[%s145 + $0x10] sm:$0xff] %vm164, %v382
      %399 = vst.msk [vmem:[%s145 + $0x18] sm:$0xff] %vm164, %v383
      %400 = vst.msk [vmem:[%s145 + $0x20] sm:$0xff] %vm164, %v384
      %401 = vst.msk [vmem:[%s145 + $0x28] sm:$0xff] %vm164, %v385
      %402 = vst.msk [vmem:[%s145 + $0x30] sm:$0xff] %vm164, %v386
      %403 = vst.msk [vmem:[%s145 + $0x38] sm:$0xff] %vm164, %v387
      %404 = vst.msk [vmem:[%s145 + $0x40] sm:$0xff] %vm164, %v388
      %405 = vst.msk [vmem:[%s145 + $0x48] sm:$0xff] %vm164, %v389
      %406 = vst.msk [vmem:[%s145 + $0x50] sm:$0xff] %vm164, %v390
      %407 = vst.msk [vmem:[%s145 + $0x58] sm:$0xff] %vm164, %v391
      %408 = vst.msk [vmem:[%s145 + $0x60] sm:$0xff] %vm164, %v392
      %409 = vst.msk [vmem:[%s145 + $0x68] sm:$0xff] %vm164, %v393
      %410 = vst.msk [vmem:[%s145 + $0x70] sm:$0xff] %vm164, %v394
      %411 = vst.msk [vmem:[%s145 + $0x78] sm:$0xff] %vm164, %v395
      %s412 = smul.u32 16, %s13
      %p413 = scmp.lt.s32.totalorder %s412, 63
      %s414 = scalar_select %p413, %s412, 63
      %s415 = smul.addr %s414, 8
      %s416 = scalar_lea.vmem %s2, %s415
      // Predicated region
      $region29: #{tpu_custom_call.1} parent=27 // pred_check
        %p417 = pneg %p78
      $region30: #{tpu_custom_call.1} parent=27 // pred_check_branch
        %419 = sbr.rel (%p417) target = $region32
      $region31: #{tpu_custom_call.1} parent=27 // pred_region
        %s420 = smul.u32 16, %s13
      $region32: #{tpu_custom_call.1} parent=27 // pred_fallthru
        _
    $region28: #{tpu_custom_call.1} parent=5 // pred_fallthru
      _
    %p421 = scmp.le.s32.totalorder 2, %s8
    // Predicated region
    $region33: #{tpu_custom_call.1} parent=5 // pred_check
      %p422 = pneg %p421
    $region34: #{tpu_custom_call.1} parent=5 // pred_check_branch
      %424 = sbr.rel (%p422) target = $region36
    $region35: #{tpu_custom_call.1} parent=5 // pred_region
      %s425 = ssub.s32 %s8, 2
      // Predicated region
      $region37: #{tpu_custom_call.1} parent=35 // pred_check
        %p426 = pneg %p84
      $region38: #{tpu_custom_call.1} parent=35 // pred_check_branch
        %428 = sbr.rel (%p426) target = $region40
      $region39: #{tpu_custom_call.1} parent=35 // pred_region
        %s429 = smul.u32 16, %s14
        %p430 = scmp.lt.s32.totalorder %s429, 63
        %s431 = scalar_select %p430, %s429, 63
        %s432 = smul.addr %s431, 8
        %s433 = scalar_lea.vmem %s2, %s432
      $region40: #{tpu_custom_call.1} parent=35 // pred_fallthru
        _
    $region36: #{tpu_custom_call.1} parent=5 // pred_fallthru
      _
  $region6: #{tpu_custom_call.1} parent=0 // loop_footer
    %s12 = sadd.s32 1, %s8
  $region7: #{tpu_custom_call.1} parent=0 // loop_footer_branch
    %7 = sbr.rel target = $region3
  $region8: #{tpu_custom_call.1} parent=0 // loop_exit
    _

</llo_original>
